<compile_context>
chip_gen: v7x
topology: tpu7x:2x2x1
jax: 0.10.0
libtpu: 0.0.40
codegen_flags: <defaults>
</compile_context>

<pallas_src>
import jax
import jax.numpy as jnp
from jax.experimental import pallas as pl
from jax.experimental.pallas import tpu as pltpu


def _round_up(x, m):
    return ((x + m - 1) // m) * m


def _mlp_embedder_kernel(x_ref, w_in_ref, b_in_ref, w_out_ref, b_out_ref,
                         o_ref, h_ref):
    # First layer + SiLU: computed once per row tile (inner N axis starts at
    # j == 0 on every core), stored to a bf16 VMEM scratch for reuse.
    @pl.when(pl.program_id(1) == 0)
    def _():
        h = jnp.dot(x_ref[...], w_in_ref[...],
                    preferred_element_type=jnp.float32)
        h = h + b_in_ref[...].astype(jnp.float32)
        h = h * jax.nn.sigmoid(h)            # SiLU in f32 (sigmoid -> EUP)
        h_ref[...] = h.astype(h_ref.dtype)

    # Second layer on the current output-column tile of W_out.
    y = jnp.dot(h_ref[...], w_out_ref[...],
                preferred_element_type=jnp.float32)
    y = y + b_out_ref[...].astype(jnp.float32)
    o_ref[...] = y.astype(o_ref.dtype)


def mlp_embedder(x, w_in, b_in, w_out, b_out, *, tm=None, tn=1536,
                 compute_dtype=jnp.bfloat16):
    """Fused y = silu(x @ w_in + b_in) @ w_out + b_out.

    x:     [..., in_dim]
    w_in:  [in_dim, hidden]   (pre-transposed vs. torch Linear.weight)
    b_in:  [hidden]
    w_out: [hidden, hidden]
    b_out: [hidden]

    Mixed precision: x / w_in / w_out are cast to `compute_dtype` (bf16) for
    the MXU; accumulation and bias-add are f32; output keeps x.dtype.
    """
    in_dim = x.shape[-1]
    hidden = w_in.shape[1]
    lead_shape = x.shape[:-1]
    out_dtype = x.dtype

    x2d = x.reshape(-1, in_dim)
    M = x2d.shape[0]

    # Per-TensorCore VMEM capacity (v5e/v6e: 128 MiB, v7x: 64 MiB).
    try:
        vmem_cap = int(pltpu.get_tpu_info().vmem_capacity_bytes)
    except Exception:  # pragma: no cover - conservative fallback
        vmem_cap = 64 << 20

    # Row tile: big on 128 MiB parts, moderate on 64 MiB (v7x); clamp to M.
    if tm is None:
        tm = 512 if vmem_cap >= (96 << 20) else 256
    sub = 16 if jnp.dtype(compute_dtype).itemsize == 2 else 8
    tm = max(sub, _round_up(min(tm, _round_up(max(M, 1), sub)), sub))

    # Output-column tile: streams W_out as (hidden, tn) slabs.
    if hidden % 128 == 0:
        tn = min(_round_up(tn, 128), hidden)
    else:
        tn = hidden  # full-dim block (still legal even if not 128-aligned)

    # Lane-dense K: only pad when in_dim is not already 128-aligned
    # (zero K-columns are mathematically exact).  Flux (256) skips this copy.
    in_p = _round_up(in_dim, 128)
    xc = x2d.astype(compute_dtype)
    w_in_c = w_in.astype(compute_dtype)
    w_out_c = w_out.astype(compute_dtype)
    if in_p != in_dim:
        xc = jnp.pad(xc, ((0, 0), (0, in_p - in_dim)))
        w_in_c = jnp.pad(w_in_c, ((0, in_p - in_dim), (0, 0)))

    b_in2d = b_in.reshape(1, hidden)
    b_out2d = b_out.reshape(1, hidden)

    grid = (pl.cdiv(M, tm), pl.cdiv(hidden, tn))

    # VMEM working-set estimate (+ headroom), clamped to device capacity.
    cb = jnp.dtype(compute_dtype).itemsize
    ob = jnp.dtype(out_dtype).itemsize
    needed = (
        in_p * hidden * cb            # W_in, resident (Buffered(1))
        + 2 * hidden * tn * cb        # W_out column tile, double buffered
        + 2 * 8 * hidden * 4          # b_in (sublane padded)
        + 2 * 8 * tn * 4              # b_out tiles
        + 2 * tm * in_p * cb          # x row tile, double buffered
        + 2 * tm * tn * ob            # out tile, double buffered
        + tm * hidden * cb            # h scratch (bf16)
        + tm * hidden * 4             # f32 h intermediate
        + tm * tn * 4                 # f32 y intermediate
    )
    vmem_limit = int(max(min(needed + (8 << 20), vmem_cap - (8 << 20)),
                         32 << 20))
    vmem_limit = min(vmem_limit, vmem_cap - (4 << 20))

    cost = pl.CostEstimate(
        flops=2 * M * (in_p * hidden + hidden * hidden),
        transcendentals=M * hidden,
        bytes_accessed=(M * in_p * cb
                        + (in_p * hidden + hidden * hidden) * cb
                        + 2 * hidden * 4
                        + M * hidden * ob),
    )

    out2d = pl.pallas_call(
        _mlp_embedder_kernel,
        out_shape=jax.ShapeDtypeStruct((M, hidden), out_dtype),
        grid_spec=pltpu.PrefetchScalarGridSpec(
            num_scalar_prefetch=0,
            grid=grid,
            in_specs=[
                pl.BlockSpec((tm, in_p), lambda i, j: (i, 0)),        # x tile
                pl.BlockSpec((in_p, hidden), lambda i, j: (0, 0),
                             pipeline_mode=pl.Buffered(1)),           # W_in (resident)
                pl.BlockSpec((1, hidden), lambda i, j: (0, 0),
                             pipeline_mode=pl.Buffered(1)),           # b_in
                pl.BlockSpec((hidden, tn), lambda i, j: (0, j)),      # W_out (streamed)
                pl.BlockSpec((1, tn), lambda i, j: (0, j)),           # b_out
            ],
            out_specs=pl.BlockSpec((tm, tn), lambda i, j: (i, j)),
            scratch_shapes=[pltpu.VMEM((tm, hidden), compute_dtype)],  # h
        ),
        compiler_params=pltpu.CompilerParams(
            # M tiles shard across TensorCores; the N axis must iterate
            # sequentially per row tile so the h scratch written at j == 0
            # stays valid for j > 0.
            # TODO(synk): on v7x with a 1-tile M grid, splitting N across the
            # 2 TCs (recomputing h per core) would halve per-TC W_out traffic.
            dimension_semantics=("parallel", "arbitrary"),
            vmem_limit_bytes=vmem_limit,
        ),
        cost_estimate=cost,
    )(xc, w_in_c, b_in2d, w_out_c, b_out2d)

    return out2d.reshape(*lead_shape, hidden)


def _init_params(key, in_dim, hidden_dim, dtype=jnp.float32):
    # Deterministic synthetic init mimicking nn.Linear's uniform(-1/sqrt(fan_in), +)
    k1, k2, k3, k4 = jax.random.split(key, 4)
    lim_in = 1.0 / jnp.sqrt(in_dim)
    lim_h = 1.0 / jnp.sqrt(hidden_dim)
    w_in = jax.random.uniform(k1, (in_dim, hidden_dim), dtype, -lim_in, lim_in)
    b_in = jax.random.uniform(k2, (hidden_dim,), dtype, -lim_in, lim_in)
    w_out = jax.random.uniform(k3, (hidden_dim, hidden_dim), dtype, -lim_h, lim_h)
    b_out = jax.random.uniform(k4, (hidden_dim,), dtype, -lim_h, lim_h)
    return w_in, b_in, w_out, b_out


def _ref(x, w_in, b_in, w_out, b_out):
    h = x @ w_in + b_in
    h = h * jax.nn.sigmoid(h)
    return h @ w_out + b_out


if __name__ == "__main__":
    key = jax.random.PRNGKey(0)
    batch, seq, in_dim, hidden_dim = 2, 8, 32, 128

    kx, kx2, kp = jax.random.split(key, 3)
    x = jax.random.normal(kx, (batch, seq, in_dim), dtype=jnp.float32)
    w_in, b_in, w_out, b_out = _init_params(kp, in_dim, hidden_dim)

    # Main case: M = batch*seq = 16 rows (bf16 compute vs f32 reference).
    y = mlp_embedder(x, w_in, b_in, w_out, b_out)
    y = jax.block_until_ready(y)
    y_ref = _ref(x, w_in, b_in, w_out, b_out)
    assert y.shape == (batch, seq, hidden_dim)
    assert y.dtype == x.dtype
    assert jnp.allclose(y, y_ref, atol=2e-2, rtol=2e-2)

    # Ragged case: M = 15 exercises the partial row-tile masking path and the
    # in_dim (32 -> 128) K-padding path.
    x_rag = jax.random.normal(kx2, (3, 5, in_dim), dtype=jnp.float32)
    y_rag = jax.block_until_ready(mlp_embedder(x_rag, w_in, b_in, w_out, b_out))
    y_rag_ref = _ref(x_rag, w_in, b_in, w_out, b_out)
    assert y_rag.shape == (3, 5, hidden_dim)
    assert jnp.allclose(y_rag, y_rag_ref, atol=2e-2, rtol=2e-2)

    print("KERNEL_OK")
</pallas_src>

<mosaic_0001>
module attributes {stable_mosaic.version = 11 : i64} {
  func.func @_mlp_embedder_kernel(%arg0: i32, %arg1: i32, %arg2: memref<16x128xbf16, #tpu.memory_space<vmem>>, %arg3: memref<128x128xbf16, #tpu.memory_space<vmem>>, %arg4: memref<1x128xf32, #tpu.memory_space<vmem>>, %arg5: memref<128x128xbf16, #tpu.memory_space<vmem>>, %arg6: memref<1x128xf32, #tpu.memory_space<vmem>>, %arg7: memref<16x128xf32, #tpu.memory_space<vmem>>, %arg8: memref<16x128xbf16, #tpu.memory_space<vmem>>) attributes {dimension_semantics = [#tpu.dimension_semantics<parallel>, #tpu.dimension_semantics<arbitrary>], iteration_bounds = array<i64: 1, 1>, scalar_prefetch = 0 : i64, scratch_operands = 1 : i64, tpu.core_type = #tpu.core_type<tc>, window_params = [{transform_indices = @transform_0, window_bounds = array<i64: 16, 128>}, {pipeline_mode = #tpu.pipeline_mode<synchronous>, transform_indices = @transform_1, window_bounds = array<i64: 128, 128>}, {pipeline_mode = #tpu.pipeline_mode<synchronous>, transform_indices = @transform_2, window_bounds = array<i64: 1, 128>}, {transform_indices = @transform_3, window_bounds = array<i64: 128, 128>}, {transform_indices = @transform_4, window_bounds = array<i64: 1, 128>}, {transform_indices = @transform_5, window_bounds = array<i64: 16, 128>}]} {
    %c0_i32 = arith.constant 0 : i32
    %0 = arith.cmpi eq, %arg1, %c0_i32 : i32
    %1 = arith.extui %0 : i1 to i32
    %c0_i32_0 = arith.constant 0 : i32
    %2 = arith.cmpi ne, %1, %c0_i32_0 : i32
    scf.if %2 {
      %c0_8 = arith.constant 0 : index
      %c0_9 = arith.constant 0 : index
      %10 = vector.load %arg2[%c0_8, %c0_9] : memref<16x128xbf16, #tpu.memory_space<vmem>>, vector<16x128xbf16>
      %c0_10 = arith.constant 0 : index
      %c0_11 = arith.constant 0 : index
      %11 = vector.load %arg3[%c0_10, %c0_11] : memref<128x128xbf16, #tpu.memory_space<vmem>>, vector<128x128xbf16>
      %cst_12 = arith.constant dense<0.000000e+00> : vector<16x128xf32>
      %12 = tpu.matmul %10, %11, %cst_12 {dimension_numbers = #tpu.dot_dimension_numbers<[1], [0], [0], [1], [0, 0, 1, 1], [], []>} : vector<16x128xbf16>, vector<128x128xbf16>, vector<16x128xf32> -> vector<16x128xf32>
      %c0_13 = arith.constant 0 : index
      %c0_14 = arith.constant 0 : index
      %13 = vector.load %arg4[%c0_13, %c0_14] : memref<1x128xf32, #tpu.memory_space<vmem>>, vector<1x128xf32>
      %14 = vector.broadcast %13 : vector<1x128xf32> to vector<16x128xf32>
      %15 = arith.addf %12, %14 : vector<16x128xf32>
      %16 = arith.negf %15 : vector<16x128xf32>
      %17 = math.exp %16 : vector<16x128xf32>
      %cst_15 = arith.constant 1.000000e+00 : f32
      %18 = vector.broadcast %cst_15 : f32 to vector<16x128xf32>
      %19 = arith.addf %18, %17 : vector<16x128xf32>
      %20 = arith.divf %18, %19 : vector<16x128xf32>
      %21 = arith.mulf %15, %20 : vector<16x128xf32>
      %22 = arith.truncf %21 : vector<16x128xf32> to vector<16x128xbf16>
      %c0_16 = arith.constant 0 : index
      %c0_17 = arith.constant 0 : index
      %23 = vector.load %arg8[%c0_16, %c0_17] : memref<16x128xbf16, #tpu.memory_space<vmem>>, vector<16x128xbf16>
      tpu.vector_store %arg8[%c0_16, %c0_17], %22 {strides = array<i32>} : memref<16x128xbf16, #tpu.memory_space<vmem>>, vector<16x128xbf16>,
    } else {
    }
    %c0 = arith.constant 0 : index
    %c0_1 = arith.constant 0 : index
    %3 = vector.load %arg8[%c0, %c0_1] : memref<16x128xbf16, #tpu.memory_space<vmem>>, vector<16x128xbf16>
    %c0_2 = arith.constant 0 : index
    %c0_3 = arith.constant 0 : index
    %4 = vector.load %arg5[%c0_2, %c0_3] : memref<128x128xbf16, #tpu.memory_space<vmem>>, vector<128x128xbf16>
    %cst = arith.constant dense<0.000000e+00> : vector<16x128xf32>
    %5 = tpu.matmul %3, %4, %cst {dimension_numbers = #tpu.dot_dimension_numbers<[1], [0], [0], [1], [0, 0, 1, 1], [], []>} : vector<16x128xbf16>, vector<128x128xbf16>, vector<16x128xf32> -> vector<16x128xf32>
    %c0_4 = arith.constant 0 : index
    %c0_5 = arith.constant 0 : index
    %6 = vector.load %arg6[%c0_4, %c0_5] : memref<1x128xf32, #tpu.memory_space<vmem>>, vector<1x128xf32>
    %7 = vector.broadcast %6 : vector<1x128xf32> to vector<16x128xf32>
    %8 = arith.addf %5, %7 : vector<16x128xf32>
    %c0_6 = arith.constant 0 : index
    %c0_7 = arith.constant 0 : index
    %9 = vector.load %arg7[%c0_6, %c0_7] : memref<16x128xf32, #tpu.memory_space<vmem>>, vector<16x128xf32>
    tpu.vector_store %arg7[%c0_6, %c0_7], %8 {strides = array<i32>} : memref<16x128xf32, #tpu.memory_space<vmem>>, vector<16x128xf32>,
    return
  }
  func.func @transform_0(%arg0: i32, %arg1: i32) -> (i32, i32) {
    %c0_i32 = arith.constant 0 : i32
    %c0_i32_0 = arith.constant 0 : i32
    return %arg0, %c0_i32 : i32, i32
  }
  func.func @transform_1(%arg0: i32, %arg1: i32) -> (i32, i32) {
    %c0_i32 = arith.constant 0 : i32
    %c0_i32_0 = arith.constant 0 : i32
    %c0_i32_1 = arith.constant 0 : i32
    return %c0_i32, %c0_i32_0 : i32, i32
  }
  func.func @transform_2(%arg0: i32, %arg1: i32) -> (i32, i32) {
    %c0_i32 = arith.constant 0 : i32
    %c0_i32_0 = arith.constant 0 : i32
    %c0_i32_1 = arith.constant 0 : i32
    return %c0_i32, %c0_i32_0 : i32, i32
  }
  func.func @transform_3(%arg0: i32, %arg1: i32) -> (i32, i32) {
    %c0_i32 = arith.constant 0 : i32
    %c0_i32_0 = arith.constant 0 : i32
    return %c0_i32, %arg1 : i32, i32
  }
  func.func @transform_4(%arg0: i32, %arg1: i32) -> (i32, i32) {
    %c0_i32 = arith.constant 0 : i32
    %c0_i32_0 = arith.constant 0 : i32
    return %c0_i32, %arg1 : i32, i32
  }
  func.func @transform_5(%arg0: i32, %arg1: i32) -> (i32, i32) {
    %c0_i32 = arith.constant 0 : i32
    return %arg0, %arg1 : i32, i32
  }
}

</mosaic_0001>

<llo_original>
// kernel: tpu_custom_call.1
$region0: #{tpu_custom_call.1}
  #allocation0 [shape = 'u32[]', space=smem, size = 0x4, offset = 0x4, fixed_abs, tag = 'smem constant byte address 0x4 - core index']
  #allocation1 [shape = 'u32[144,128]{1,0:T(1,128)}', space=vmem, size = 0x12000, scoped, tag = 'internal scratch']
  #allocation2 [shape = 'bf16[16,128]{1,0:T(16,128)(2,1)}', space=vmem, size = 0x1000, scoped, tag = 'scratch operand']
  %s0 = inlined_call_operand.hbm [shape: bf16[16,128], index: 0, kind: input, shape index: {}]
  %s1 = inlined_call_operand.hbm [shape: bf16[128,128], index: 1, kind: input, shape index: {}]
  %s2 = inlined_call_operand.vmem [shape: f32[1,128], index: 2, kind: input, shape index: {}]
  %s3 = inlined_call_operand.hbm [shape: bf16[128,128], index: 3, kind: input, shape index: {}]
  %s4 = inlined_call_operand.vmem [shape: f32[1,128], index: 4, kind: input, shape index: {}]
  %s5 = inlined_call_operand.hbm [shape: f32[16,128], index: 5, kind: output, shape index: {}]
  %s6 = sld [smem:[#allocation0]]
  $region46: #{tpu_custom_call.1} parent=0
    _
  %s8 = ssub.s32 1, %s6
  %s9 = scalar_select 0, %s8, %s6
  $region1: #{tpu_custom_call.1} parent=0
    #allocation3 [shape = 'u8[4096]{0}', space=vmem, size = 0x1000, scoped, tag = 'input window, operand 0, single buffered']
    #allocation4 [shape = 's32[1]{0}', space=sflag, size = 0x4, scoped, tag = 'scoped memory for tpu_custom_call.1']
    #allocation5 [shape = 's32[1]{0}', space=sflag, size = 0x4, scoped, tag = 'scoped memory for tpu_custom_call.1']
    #allocation6 [shape = 'u8[32768]{0}', space=vmem, size = 0x8000, scoped, tag = 'input window, operand 1, single buffered']
    #allocation7 [shape = 's32[1]{0}', space=sflag, size = 0x4, scoped, tag = 'scoped memory for tpu_custom_call.1']
    #allocation8 [shape = 'u8[32768]{0}', space=vmem, size = 0x8000, scoped, tag = 'input window, operand 3, single buffered']
    #allocation9 [shape = 'u8[8192]{0}', space=vmem, size = 0x2000, scoped, tag = 'output window, operand 0, single buffered']
    %10 = vsyncpa [#allocation4], 0
    %11 = vsyncpa [#allocation7], 0
    %12 = vsyncpa [#allocation5], 0
    // Predicated region
    $region2: #{tpu_custom_call.1} parent=1 // pred_check
      _
    $region3: #{tpu_custom_call.1} parent=1 // pred_check_branch
      %14 = sbr.rel (0) target = $region5
    $region4: #{tpu_custom_call.1} parent=1 // pred_region
      %s16 = ssub.s32 128, 128
      %17 = vsyncadd [#allocation4], %s16
      %s18 = sshll.u32 [#allocation3], 4
      %s19 = int_to_ptr.vmem [resolvable:$true] %s18
      %24 = dma.hbm_to_vmem [thread:$0]  %s0, 128, %s19, [#allocation4], 64, 64, 4
    $region5: #{tpu_custom_call.1} parent=1 // pred_fallthru
      _
    // Predicated region
    $region6: #{tpu_custom_call.1} parent=1 // pred_check
      _
    $region7: #{tpu_custom_call.1} parent=1 // pred_check_branch
      %26 = sbr.rel (0) target = $region9
    $region8: #{tpu_custom_call.1} parent=1 // pred_region
      %s28 = ssub.s32 1024, 1024
      %29 = vsyncadd [#allocation7], %s28
      %s30 = sshll.u32 [#allocation6], 4
      %s31 = int_to_ptr.vmem [resolvable:$true] %s30
      %36 = dma.hbm_to_vmem [thread:$0]  %s1, 1024, %s31, [#allocation7], 64, 64, 4
    $region9: #{tpu_custom_call.1} parent=1 // pred_fallthru
      _
    // Predicated region
    $region10: #{tpu_custom_call.1} parent=1 // pred_check
      _
    $region11: #{tpu_custom_call.1} parent=1 // pred_check_branch
      %38 = sbr.rel (0) target = $region13
    $region12: #{tpu_custom_call.1} parent=1 // pred_region
      _
    $region13: #{tpu_custom_call.1} parent=1 // pred_fallthru
      _
    // Predicated region
    $region14: #{tpu_custom_call.1} parent=1 // pred_check
      _
    $region15: #{tpu_custom_call.1} parent=1 // pred_check_branch
      %40 = sbr.rel (0) target = $region17
    $region16: #{tpu_custom_call.1} parent=1 // pred_region
      %s42 = ssub.s32 1024, 1024
      %43 = vsyncadd [#allocation7], %s42
      %s44 = sshll.u32 [#allocation8], 4
      %s45 = int_to_ptr.vmem [resolvable:$true] %s44
      %50 = dma.hbm_to_vmem [thread:$0]  %s3, 1024, %s45, [#allocation7], 64, 64, 4
    $region17: #{tpu_custom_call.1} parent=1 // pred_fallthru
      _
    // Predicated region
    $region18: #{tpu_custom_call.1} parent=1 // pred_check
      _
    $region19: #{tpu_custom_call.1} parent=1 // pred_check_branch
      %52 = sbr.rel (0) target = $region21
    $region20: #{tpu_custom_call.1} parent=1 // pred_region
      _
    $region21: #{tpu_custom_call.1} parent=1 // pred_fallthru
      _
    // Predicated region
    $region22: #{tpu_custom_call.1} parent=1 // pred_check
      _
    $region23: #{tpu_custom_call.1} parent=1 // pred_check_branch
      %54 = sbr.rel (0) target = $region25
    $region24: #{tpu_custom_call.1} parent=1 // pred_region
      %55 = dma.done [#allocation4], 128
    $region25: #{tpu_custom_call.1} parent=1 // pred_fallthru
      _
    // Predicated region
    $region26: #{tpu_custom_call.1} parent=1 // pred_check
      _
    $region27: #{tpu_custom_call.1} parent=1 // pred_check_branch
      %57 = sbr.rel (0) target = $region29
    $region28: #{tpu_custom_call.1} parent=1 // pred_region
      %58 = dma.done [#allocation7], 1024
    $region29: #{tpu_custom_call.1} parent=1 // pred_fallthru
      _
    // Predicated region
    $region30: #{tpu_custom_call.1} parent=1 // pred_check
      _
    $region31: #{tpu_custom_call.1} parent=1 // pred_check_branch
      %60 = sbr.rel (0) target = $region33
    $region32: #{tpu_custom_call.1} parent=1 // pred_region
      %61 = dma.done [#allocation7], 1024
    $region33: #{tpu_custom_call.1} parent=1 // pred_fallthru
      _
    %p63 = scmp.eq.s32.totalorder 0, 0
    // Predicated region
    $region34: #{tpu_custom_call.1} parent=1 // pred_check
      %p64 = pneg %p63
    $region35: #{tpu_custom_call.1} parent=1 // pred_check_branch
      %66 = sbr.rel (%p64) target = $region37
    $region36: #{tpu_custom_call.1} parent=1 // pred_region
      %v67 = vld [vmem:[#allocation3] sm:$0xf]
      %v68 = vld [vmem:[#allocation3 + $0x4] sm:$0xf]
      %v69 = vld [vmem:[#allocation6] sm:$0xf]
      %v70 = vld [vmem:[#allocation6 + $0x4] sm:$0xf]
      %v71 = vld [vmem:[#allocation6 + $0x8] sm:$0xf]
      %v72 = vld [vmem:[#allocation6 + $0xc] sm:$0xf]
      %v73 = vld [vmem:[#allocation6 + $0x10] sm:$0xf]
      %v74 = vld [vmem:[#allocation6 + $0x14] sm:$0xf]
      %v75 = vld [vmem:[#allocation6 + $0x18] sm:$0xf]
      %v76 = vld [vmem:[#allocation6 + $0x1c] sm:$0xf]
      %v77 = vld [vmem:[#allocation6 + $0x20] sm:$0xf]
      %v78 = vld [vmem:[#allocation6 + $0x24] sm:$0xf]
      %v79 = vld [vmem:[#allocation6 + $0x28] sm:$0xf]
      %v80 = vld [vmem:[#allocation6 + $0x2c] sm:$0xf]
      %v81 = vld [vmem:[#allocation6 + $0x30] sm:$0xf]
      %v82 = vld [vmem:[#allocation6 + $0x34] sm:$0xf]
      %v83 = vld [vmem:[#allocation6 + $0x38] sm:$0xf]
      %v84 = vld [vmem:[#allocation6 + $0x3c] sm:$0xf]
      %v85 = vld [vmem:[%s2] sm:$0x1]
      %v87 = vlaneseq
      %v88 = vshrl.u32 %v87, 7
      %v89 = vsub.s32 0, %v88
      %v90 = vrot.slane %v85, %v89
      %v94 = vunpack.c.l.b16 %v67
      %v95 = vunpack.c.l.b16 %v68
      %v96 = vpack.c.b16 %v95, %v94
      %v114 = vunpack.c.l.b16 %v69
      %v115 = vunpack.c.l.b16 %v70
      %v116 = vunpack.c.l.b16 %v71
      %v117 = vunpack.c.l.b16 %v72
      %v118 = vunpack.c.l.b16 %v73
      %v119 = vunpack.c.l.b16 %v74
      %v120 = vunpack.c.l.b16 %v75
      %v121 = vunpack.c.l.b16 %v76
      %v122 = vunpack.c.l.b16 %v77
      %v123 = vunpack.c.l.b16 %v78
      %v124 = vunpack.c.l.b16 %v79
      %v125 = vunpack.c.l.b16 %v80
      %v126 = vunpack.c.l.b16 %v81
      %v127 = vunpack.c.l.b16 %v82
      %v128 = vunpack.c.l.b16 %v83
      %v129 = vunpack.c.l.b16 %v84
      %v130 = vpack.c.b16 %v115, %v114
      %v131 = vpack.c.b16 %v117, %v116
      %v132 = vpack.c.b16 %v119, %v118
      %v133 = vpack.c.b16 %v121, %v120
      %v134 = vpack.c.b16 %v123, %v122
      %v135 = vpack.c.b16 %v125, %v124
      %v136 = vpack.c.b16 %v127, %v126
      %v137 = vpack.c.b16 %v129, %v128
      %146 = vmatprep.subr.bf16.mxu0 0
      %147 = vmatpush1.bf16.msra.mxu0 %v130
      %148 = vmatprep.subr.bf16.mxu0 0
      %149 = vmatpush1.bf16.msra.mxu0 %v131
      %150 = vmatprep.subr.bf16.mxu0 0
      %151 = vmatpush1.bf16.msra.mxu0 %v132
      %152 = vmatprep.subr.bf16.mxu0 0
      %153 = vmatpush1.bf16.msra.mxu0 %v133
      %154 = vmatprep.subr.bf16.mxu0 0
      %155 = vmatpush1.bf16.msra.mxu0 %v134
      %156 = vmatprep.subr.bf16.mxu0 0
      %157 = vmatpush1.bf16.msra.mxu0 %v135
      %158 = vmatprep.subr.bf16.mxu0 0
      %159 = vmatpush1.bf16.msra.mxu0 %v136
      %160 = vmatprep.subr.bf16.mxu0 0
      %161 = vmatpush1.bf16.msra.mxu0 %v137
      %162 = vmatprep.subr.bf16.mxu0 0
      %163 = vmatpush1.bf16.msra.mxu0 0
      %164 = vmatprep.subr.bf16.mxu0 0
      %165 = vmatpush1.bf16.msra.mxu0 0
      %166 = vmatprep.subr.bf16.mxu0 0
      %167 = vmatpush1.bf16.msra.mxu0 0
      %168 = vmatprep.subr.bf16.mxu0 0
      %169 = vmatpush1.bf16.msra.mxu0 0
      %170 = vmatprep.subr.bf16.mxu0 0
      %171 = vmatpush1.bf16.msra.mxu0 0
      %172 = vmatprep.subr.bf16.mxu0 0
      %173 = vmatpush1.bf16.msra.mxu0 0
      %174 = vmatprep.subr.bf16.mxu0 0
      %175 = vmatpush1.bf16.msra.mxu0 0
      %176 = vmatprep.subr.bf16.mxu0 0
      %177 = vmatpush1.bf16.msra.mxu0 0
      %178 = vmatprep.mubr.bf16.mxu0 0
      %179 = vmatmul.mubr.bf16.gmra.mrb[0].mxu0 %v96
      %v180 = vpop.f32.mrb[0].mxu0
      %v181 = vadd.f32 %v90, %v180
      %v182 = vpop.f32.mrb[0].mxu0
      %v183 = vpop.f32.mrb[0].mxu0
      %v184 = vadd.f32 %v90, %v183
      %v185 = vpop.f32.mrb[0].mxu0
      %186 = vdwg.mxu0
      %v187 = vxor.u32 %v181, 2147483648
      %v188 = vxor.u32 %v184, 2147483648
      %v189 = vmul.f32 %v187, 1.442695
      %v190 = vpow.pop %v189
      %v191 = vmul.f32 %v188, 1.442695
      %v192 = vpow.pop %v191
      %v193 = vadd.f32 %v190, 1.0
      %v194 = vadd.f32 %v192, 1.0
      %v195 = vrcp.pop %v193
      %v196 = vmul.f32 1.0, %v195
      %v197 = vrcp.pop %v194
      %v198 = vmul.f32 1.0, %v197
      %v199 = vmul.f32 %v181, %v196
      %v200 = vmul.f32 %v184, %v198
      %v201 = vpack.c.bf16 %v200, %v199
      %202 = vst [vmem:[#allocation2] sm:$0xff] %v201
    $region37: #{tpu_custom_call.1} parent=1 // pred_fallthru
      _
    %v203 = vld [vmem:[#allocation2] sm:$0xff]
    %v204 = vld [vmem:[#allocation8] sm:$0xf]
    %v205 = vld [vmem:[#allocation8 + $0x4] sm:$0xf]
    %v206 = vld [vmem:[#allocation8 + $0x8] sm:$0xf]
    %v207 = vld [vmem:[#allocation8 + $0xc] sm:$0xf]
    %v208 = vld [vmem:[#allocation8 + $0x10] sm:$0xf]
    %v209 = vld [vmem:[#allocation8 + $0x14] sm:$0xf]
    %v210 = vld [vmem:[#allocation8 + $0x18] sm:$0xf]
    %v211 = vld [vmem:[#allocation8 + $0x1c] sm:$0xf]
    %v212 = vld [vmem:[#allocation8 + $0x20] sm:$0xf]
    %v213 = vld [vmem:[#allocation8 + $0x24] sm:$0xf]
    %v214 = vld [vmem:[#allocation8 + $0x28] sm:$0xf]
    %v215 = vld [vmem:[#allocation8 + $0x2c] sm:$0xf]
    %v216 = vld [vmem:[#allocation8 + $0x30] sm:$0xf]
    %v217 = vld [vmem:[#allocation8 + $0x34] sm:$0xf]
    %v218 = vld [vmem:[#allocation8 + $0x38] sm:$0xf]
    %v219 = vld [vmem:[#allocation8 + $0x3c] sm:$0xf]
    %v220 = vld [vmem:[%s4] sm:$0x1]
    %v222 = vlaneseq
    %v223 = vshrl.u32 %v222, 7
    %v224 = vsub.s32 0, %v223
    %v225 = vrot.slane %v220, %v224
    %v243 = vunpack.c.l.b16 %v204
    %v244 = vunpack.c.l.b16 %v205
    %v245 = vunpack.c.l.b16 %v206
    %v246 = vunpack.c.l.b16 %v207
    %v247 = vunpack.c.l.b16 %v208
    %v248 = vunpack.c.l.b16 %v209
    %v249 = vunpack.c.l.b16 %v210
    %v250 = vunpack.c.l.b16 %v211
    %v251 = vunpack.c.l.b16 %v212
    %v252 = vunpack.c.l.b16 %v213
    %v253 = vunpack.c.l.b16 %v214
    %v254 = vunpack.c.l.b16 %v215
    %v255 = vunpack.c.l.b16 %v216
    %v256 = vunpack.c.l.b16 %v217
    %v257 = vunpack.c.l.b16 %v218
    %v258 = vunpack.c.l.b16 %v219
    %v259 = vpack.c.b16 %v244, %v243
    %v260 = vpack.c.b16 %v246, %v245
    %v261 = vpack.c.b16 %v248, %v247
    %v262 = vpack.c.b16 %v250, %v249
    %v263 = vpack.c.b16 %v252, %v251
    %v264 = vpack.c.b16 %v254, %v253
    %v265 = vpack.c.b16 %v256, %v255
    %v266 = vpack.c.b16 %v258, %v257
    %275 = vmatprep.subr.bf16.mxu0 0
    %276 = vmatpush1.bf16.msra.mxu0 %v259
    %277 = vmatprep.subr.bf16.mxu0 0
    %278 = vmatpush1.bf16.msra.mxu0 %v260
    %279 = vmatprep.subr.bf16.mxu0 0
    %280 = vmatpush1.bf16.msra.mxu0 %v261
    %281 = vmatprep.subr.bf16.mxu0 0
    %282 = vmatpush1.bf16.msra.mxu0 %v262
    %283 = vmatprep.subr.bf16.mxu0 0
    %284 = vmatpush1.bf16.msra.mxu0 %v263
    %285 = vmatprep.subr.bf16.mxu0 0
    %286 = vmatpush1.bf16.msra.mxu0 %v264
    %287 = vmatprep.subr.bf16.mxu0 0
    %288 = vmatpush1.bf16.msra.mxu0 %v265
    %289 = vmatprep.subr.bf16.mxu0 0
    %290 = vmatpush1.bf16.msra.mxu0 %v266
    %291 = vmatprep.subr.bf16.mxu0 0
    %292 = vmatpush1.bf16.msra.mxu0 0
    %293 = vmatprep.subr.bf16.mxu0 0
    %294 = vmatpush1.bf16.msra.mxu0 0
    %295 = vmatprep.subr.bf16.mxu0 0
    %296 = vmatpush1.bf16.msra.mxu0 0
    %297 = vmatprep.subr.bf16.mxu0 0
    %298 = vmatpush1.bf16.msra.mxu0 0
    %299 = vmatprep.subr.bf16.mxu0 0
    %300 = vmatpush1.bf16.msra.mxu0 0
    %301 = vmatprep.subr.bf16.mxu0 0
    %302 = vmatpush1.bf16.msra.mxu0 0
    %303 = vmatprep.subr.bf16.mxu0 0
    %304 = vmatpush1.bf16.msra.mxu0 0
    %305 = vmatprep.subr.bf16.mxu0 0
    %306 = vmatpush1.bf16.msra.mxu0 0
    %307 = vmatprep.mubr.bf16.mxu0 0
    %308 = vmatmul.mubr.bf16.gmra.mrb[0].mxu0 %v203
    %v309 = vpop.f32.mrb[0].mxu0
    %v310 = vadd.f32 %v225, %v309
    %v311 = vpop.f32.mrb[0].mxu0
    %v312 = vpop.f32.mrb[0].mxu0
    %v313 = vadd.f32 %v225, %v312
    %v314 = vpop.f32.mrb[0].mxu0
    %315 = vdwg.mxu0
    %316 = vst [vmem:[#allocation9] sm:$0xff] %v310
    %317 = vst [vmem:[#allocation9 + $0x8] sm:$0xff] %v313
    // Predicated region
    $region38: #{tpu_custom_call.1} parent=1 // pred_check
      _
    $region39: #{tpu_custom_call.1} parent=1 // pred_check_branch
      %319 = sbr.rel (0) target = $region41
    $region40: #{tpu_custom_call.1} parent=1 // pred_region
      %s321 = ssub.s32 256, 256
      %322 = vsyncadd [#allocation5], %s321
      %s323 = sshll.u32 [#allocation9], 4
      %s324 = int_to_ptr.vmem [resolvable:$true] %s323
      %329 = dma.vmem_to_hbm [thread:$0]  %s324, 256, %s5, [#allocation5], 128, 128, 8
    $region41: #{tpu_custom_call.1} parent=1 // pred_fallthru
      _
    // Predicated region
    $region42: #{tpu_custom_call.1} parent=1 // pred_check
      _
    $region43: #{tpu_custom_call.1} parent=1 // pred_check_branch
      %331 = sbr.rel (0) target = $region45
    $region44: #{tpu_custom_call.1} parent=1 // pred_region
      %332 = dma.done [#allocation5], 256
    $region45: #{tpu_custom_call.1} parent=1 // pred_fallthru
      _
    %333 = vsyncpa [#allocation4], 1
    %334 = vsyncpa [#allocation7], 1
    %335 = vsyncpa [#allocation5], 1

</llo_original>
